<compile_context>
chip_gen: v5e
topology: v5e:2x2
jax: 0.10.0
libtpu: 0.0.40
codegen_flags: <defaults>
</compile_context>

<pallas_src>
import functools

import jax
import jax.numpy as jnp
from jax import lax
from jax.experimental import pallas as pl
from jax.experimental.pallas import tpu as pltpu


_TB_ALIGN = 1024              # out block (tb//128, 128) needs tb % 1024 == 0
_X_TARGET_BYTES = 2 << 20     # ~2 MiB of streamed x per grid step
_X_VMEM_BUDGET = 20 << 20     # budget for the double-buffered, lane-padded x block
_SUB_MAX = 2048               # max rows per inner sub-chunk (bounds live h1/h2)


def _round_up(n, m):
    return ((n + m - 1) // m) * m


def _leaky_relu(x, slope=0.2):
    return jnp.where(x >= 0, x, slope * x)


def _pick_tb(B, ndim, itemsize):
    """Batch tile for the aligned-prefix call."""
    # Target ~2 MiB of real x traffic per step.
    tb = max(_TB_ALIGN, _X_TARGET_BYTES // max(1, ndim * itemsize))
    # VMEM cost of one x block is lane-padded to a multiple of 128 lanes.
    padded_row_bytes = _round_up(max(ndim, 1), 128) * itemsize
    tb = min(tb, _X_VMEM_BUDGET // (2 * padded_row_bytes))
    # Keep >= 2 grid steps when the batch allows it (v7x megacore + pipelining).
    if B >= 2 * _TB_ALIGN:
        tb = min(tb, _round_up(B // 2, _TB_ALIGN))
    tb = max(_TB_ALIGN, (tb // _TB_ALIGN) * _TB_ALIGN)
    return tb


def _pick_sub(rows):
    """Largest inner sub-chunk (multiple of 128, <= _SUB_MAX) dividing `rows`."""
    for s in (_SUB_MAX, 1024, 512, 256, 128):
        if s <= rows and rows % s == 0:
            return s
    return rows


def _make_kernel(sub, n_sub):
    rows_per_sub = sub // 128

    def kernel(x_ref, w1_ref, b1_ref, w2_ref, b2_ref, w3_ref, b3_ref, o_ref):
        w1 = w1_ref[...]
        b1 = b1_ref[...]
        w2 = w2_ref[...]
        b2 = b2_ref[...]
        w3 = w3_ref[...]
        b3 = b3_ref[0, 0]

        def step(c):
            r = c * sub
            ro = c * rows_per_sub
            if not isinstance(c, int):          # dynamic loop index -> alignment hints
                r = pl.multiple_of(r, sub)
                ro = pl.multiple_of(ro, rows_per_sub)

            x = x_ref[pl.ds(r, sub), :]                               # (sub, ndim)
            # Layer 1 (the only real matmul) on the MXU, f32 accumulation.
            h1 = jnp.dot(x, w1, preferred_element_type=jnp.float32)
            h1 = _leaky_relu(h1 + b1)                                 # (sub, 16)
            # Layer 2: tiny matmul; MXU is otherwise idle.
            h2 = jnp.dot(h1, w2, preferred_element_type=jnp.float32)
            h2 = _leaky_relu(h2 + b2)                                 # (sub, 8)
            # Layer 3 on VPU/XLU instead of a near-empty (sub,8)@(8,1) matmul.
            score = jnp.sum(h2 * w3, axis=-1) + b3                    # (sub,)
            o_ref[pl.ds(ro, rows_per_sub), :] = (
                score.reshape(rows_per_sub, 128).astype(o_ref.dtype))

        if n_sub == 1:
            step(0)
        else:
            def body(c, carry):
                step(c)
                return carry
            lax.fori_loop(0, n_sub, body, 0)

    return kernel


def _scores(x_part, tb, params, out_dtype):
    """Run the fused MLP on x_part (rows % tb == 0, tb % 128 == 0).

    Returns a flat (rows,) array of scores in batch order (dtype out_dtype)."""
    rows, ndim = x_part.shape
    assert rows % tb == 0 and tb % 128 == 0
    num_tiles = rows // tb
    sub = _pick_sub(tb)
    n_sub = tb // sub

    w1, b1 = params["w1"], params["b1"]     # (ndim,16), (1,16)
    w2, b2 = params["w2"], params["b2"]     # (16,8),    (1,8)
    w3, b3 = params["w3"], params["b3"]     # (1,8) row, (1,1)
    if x_part.dtype == jnp.bfloat16:
        # Native bf16 MXU pass for the only large matmul; accumulation stays f32.
        w1 = w1.astype(jnp.bfloat16)

    itemsize = x_part.dtype.itemsize
    out_itemsize = jnp.dtype(out_dtype).itemsize

    # Advisory cost estimate so XLA schedules the surrounding slice/concat well.
    flops = int(2 * rows * (ndim * 16 + 16 * 8 + 8))
    w_bytes = sum(int(a.size) * a.dtype.itemsize for a in (w1, b1, w2, b2, w3, b3))
    bytes_accessed = int(rows * ndim * itemsize + rows * out_itemsize + w_bytes)

    # Scoped-VMEM limit from the actual (lane-padded, double-buffered) footprint.
    x_block_vmem = tb * _round_up(max(ndim, 1), 128) * itemsize
    out_block_vmem = tb * out_itemsize
    vmem_need = 2 * (x_block_vmem + out_block_vmem) + (8 << 20)   # + intermediates/weights slack
    vmem_limit = int(min(max(vmem_need, 16 << 20), 48 << 20))     # v7x-safe cap

    full = lambda a: pl.BlockSpec(a.shape, lambda i: (0, 0))
    kernel = _make_kernel(sub, n_sub)

    out = pl.pallas_call(
        kernel,
        out_shape=jax.ShapeDtypeStruct((rows // 128, 128), out_dtype),
        grid_spec=pltpu.PrefetchScalarGridSpec(
            num_scalar_prefetch=0,
            grid=(num_tiles,),
            in_specs=[
                pl.BlockSpec((tb, ndim), lambda i: (i, 0)),   # streamed x tile
                full(w1), full(b1),
                full(w2), full(b2),
                full(w3), full(b3),
            ],
            # Lane-dense output: tb scores per step as (tb//128, 128) blocks.
            out_specs=pl.BlockSpec((tb // 128, 128), lambda i: (i, 0)),
        ),
        compiler_params=pltpu.CompilerParams(
            dimension_semantics=("parallel",),       # megacore-shardable batch axis
            vmem_limit_bytes=vmem_limit),
        cost_estimate=pl.CostEstimate(
            flops=flops, transcendentals=0, bytes_accessed=bytes_accessed),
    )(x_part, w1, b1, w2, b2, w3, b3)

    return out.reshape(-1)                       # (rows,) in batch order


def discriminator_forward(x, params, *, tb=None, out_dtype=jnp.float32):
    """x: (B, ndim) float32 or bfloat16.  Returns (B, 1) validity scores (f32)."""
    B, ndim = x.shape
    if B == 0:
        return jnp.zeros((0, 1), out_dtype)
    if tb is None:
        tb = _pick_tb(B, ndim, x.dtype.itemsize)
    else:
        tb = max(_TB_ALIGN, _round_up(tb, _TB_ALIGN))

    pieces = []
    num_full = B // tb
    if num_full > 0:
        # Aligned prefix: no padding copy, streamed in tb-row tiles.
        pieces.append(_scores(x[: num_full * tb], tb, params, out_dtype))
    tail = B - num_full * tb
    if tail > 0:
        # Only the (< tb row) tail gets padded -- cheap compared to padding all of x.
        x_tail = x[num_full * tb:]
        tail_pad = _round_up(tail, 128)
        if tail_pad != tail:
            x_tail = jnp.pad(x_tail, ((0, tail_pad - tail), (0, 0)))
        pieces.append(_scores(x_tail, tail_pad, params, out_dtype)[:tail])

    scores = pieces[0] if len(pieces) == 1 else jnp.concatenate(pieces)
    return scores.reshape(B, 1)


def init_params(key, ndim):
    """Deterministic init mirroring nn.Linear; w1/w2 stored transposed (in,out),
    w3 kept in PyTorch (out=1, in=8) row layout."""
    ks = jax.random.split(key, 6)

    def linear(kw, kb, fan_in, fan_out, transpose=True):
        bound = 1.0 / (fan_in ** 0.5)
        shape = (fan_in, fan_out) if transpose else (fan_out, fan_in)
        w = jax.random.uniform(kw, shape, jnp.float32, -bound, bound)
        b = jax.random.uniform(kb, (1, fan_out), jnp.float32, -bound, bound)
        return w, b

    w1, b1 = linear(ks[0], ks[1], ndim, 16)
    w2, b2 = linear(ks[2], ks[3], 16, 8)
    w3, b3 = linear(ks[4], ks[5], 8, 1, transpose=False)   # (1, 8), (1, 1)
    return dict(w1=w1, b1=b1, w2=w2, b2=b2, w3=w3, b3=b3)


def reference_forward(x, p):
    h1 = _leaky_relu(x @ p["w1"] + p["b1"])
    h2 = _leaky_relu(h1 @ p["w2"] + p["b2"])
    return h2 @ p["w3"].T + p["b3"]


if __name__ == "__main__":
    key = jax.random.PRNGKey(0)
    kx, kp, kx2 = jax.random.split(key, 3)

    ndim = 32
    params = init_params(kp, ndim)

    # Small batch: tail-only path (8 rows padded to one 128-row block).
    x_small = jax.random.normal(kx, (8, ndim), jnp.float32)
    out_small = jax.block_until_ready(discriminator_forward(x_small, params))
    ref_small = reference_forward(x_small, params)
    assert out_small.shape == (8, 1)
    assert jnp.allclose(out_small, ref_small, atol=2e-5, rtol=2e-5)

    # Larger ragged batch: aligned prefix call + small padded tail call.
    x_big = jax.random.normal(kx2, (3000, ndim), jnp.float32)
    out_big = jax.block_until_ready(discriminator_forward(x_big, params))
    ref_big = reference_forward(x_big, params)
    assert out_big.shape == (3000, 1)
    assert jnp.allclose(out_big, ref_big, atol=2e-5, rtol=2e-5)

    print("KERNEL_OK")
</pallas_src>

<mosaic_0001>
module attributes {stable_mosaic.version = 11 : i64} {
  func.func @kernel(%arg0: i32, %arg1: memref<128x32xf32, #tpu.memory_space<vmem>>, %arg2: memref<32x16xf32, #tpu.memory_space<vmem>>, %arg3: memref<1x16xf32, #tpu.memory_space<vmem>>, %arg4: memref<16x8xf32, #tpu.memory_space<vmem>>, %arg5: memref<1x8xf32, #tpu.memory_space<vmem>>, %arg6: memref<1x8xf32, #tpu.memory_space<vmem>>, %arg7: memref<1x1xf32, #tpu.memory_space<vmem>>, %arg8: memref<1x128xf32, #tpu.memory_space<vmem>>) attributes {dimension_semantics = [#tpu.dimension_semantics<parallel>], iteration_bounds = array<i64: 1>, scalar_prefetch = 0 : i64, scratch_operands = 0 : i64, tpu.core_type = #tpu.core_type<tc>, window_params = [{transform_indices = @transform_0, window_bounds = array<i64: 128, 32>}, {pipeline_mode = #tpu.pipeline_mode<synchronous>, transform_indices = @transform_1, window_bounds = array<i64: 32, 16>}, {pipeline_mode = #tpu.pipeline_mode<synchronous>, transform_indices = @transform_2, window_bounds = array<i64: 1, 16>}, {pipeline_mode = #tpu.pipeline_mode<synchronous>, transform_indices = @transform_3, window_bounds = array<i64: 16, 8>}, {pipeline_mode = #tpu.pipeline_mode<synchronous>, transform_indices = @transform_4, window_bounds = array<i64: 1, 8>}, {pipeline_mode = #tpu.pipeline_mode<synchronous>, transform_indices = @transform_5, window_bounds = array<i64: 1, 8>}, {pipeline_mode = #tpu.pipeline_mode<synchronous>, transform_indices = @transform_6, window_bounds = array<i64: 1, 1>}, {transform_indices = @transform_7, window_bounds = array<i64: 1, 128>}]} {
    %c0 = arith.constant 0 : index
    %c0_0 = arith.constant 0 : index
    %0 = vector.load %arg2[%c0, %c0_0] : memref<32x16xf32, #tpu.memory_space<vmem>>, vector<32x16xf32>
    %c0_1 = arith.constant 0 : index
    %c0_2 = arith.constant 0 : index
    %1 = vector.load %arg3[%c0_1, %c0_2] : memref<1x16xf32, #tpu.memory_space<vmem>>, vector<1x16xf32>
    %c0_3 = arith.constant 0 : index
    %c0_4 = arith.constant 0 : index
    %2 = vector.load %arg4[%c0_3, %c0_4] : memref<16x8xf32, #tpu.memory_space<vmem>>, vector<16x8xf32>
    %c0_5 = arith.constant 0 : index
    %c0_6 = arith.constant 0 : index
    %3 = vector.load %arg5[%c0_5, %c0_6] : memref<1x8xf32, #tpu.memory_space<vmem>>, vector<1x8xf32>
    %c0_7 = arith.constant 0 : index
    %c0_8 = arith.constant 0 : index
    %4 = vector.load %arg6[%c0_7, %c0_8] : memref<1x8xf32, #tpu.memory_space<vmem>>, vector<1x8xf32>
    %c0_9 = arith.constant 0 : index
    %c0_10 = arith.constant 0 : index
    %5 = vector.load %arg7[%c0_9, %c0_10] : memref<1x1xf32, #tpu.memory_space<vmem>>, vector<1x1xf32>
    %6 = vector.extract %5[0, 0] : f32 from vector<1x1xf32>
    %c0_11 = arith.constant 0 : index
    %c0_12 = arith.constant 0 : index
    %7 = vector.load %arg1[%c0_11, %c0_12] : memref<128x32xf32, #tpu.memory_space<vmem>>, vector<128x32xf32>
    %cst = arith.constant dense<0.000000e+00> : vector<128x16xf32>
    %8 = tpu.matmul %7, %0, %cst {dimension_numbers = #tpu.dot_dimension_numbers<[1], [0], [0], [1], [0, 0, 1, 1], [], []>} : vector<128x32xf32>, vector<32x16xf32>, vector<128x16xf32> -> vector<128x16xf32>
    %9 = vector.broadcast %1 : vector<1x16xf32> to vector<128x16xf32>
    %10 = arith.addf %8, %9 : vector<128x16xf32>
    %cst_13 = arith.constant 0.000000e+00 : f32
    %11 = vector.broadcast %cst_13 : f32 to vector<128x16xf32>
    %12 = arith.cmpf oge, %10, %11 : vector<128x16xf32>
    %cst_14 = arith.constant 2.000000e-01 : f32
    %13 = vector.broadcast %cst_14 : f32 to vector<128x16xf32>
    %14 = arith.mulf %13, %10 : vector<128x16xf32>
    %15 = arith.select %12, %10, %14 : vector<128x16xi1>, vector<128x16xf32>
    %cst_15 = arith.constant dense<0.000000e+00> : vector<128x8xf32>
    %16 = tpu.matmul %15, %2, %cst_15 {dimension_numbers = #tpu.dot_dimension_numbers<[1], [0], [0], [1], [0, 0, 1, 1], [], []>} : vector<128x16xf32>, vector<16x8xf32>, vector<128x8xf32> -> vector<128x8xf32>
    %17 = vector.broadcast %3 : vector<1x8xf32> to vector<128x8xf32>
    %18 = arith.addf %16, %17 : vector<128x8xf32>
    %cst_16 = arith.constant 0.000000e+00 : f32
    %19 = vector.broadcast %cst_16 : f32 to vector<128x8xf32>
    %20 = arith.cmpf oge, %18, %19 : vector<128x8xf32>
    %cst_17 = arith.constant 2.000000e-01 : f32
    %21 = vector.broadcast %cst_17 : f32 to vector<128x8xf32>
    %22 = arith.mulf %21, %18 : vector<128x8xf32>
    %23 = arith.select %20, %18, %22 : vector<128x8xi1>, vector<128x8xf32>
    %24 = vector.broadcast %4 : vector<1x8xf32> to vector<128x8xf32>
    %25 = arith.mulf %23, %24 : vector<128x8xf32>
    %cst_18 = arith.constant dense<0.000000e+00> : vector<128xf32>
    %26 = vector.multi_reduction <add>, %25, %cst_18 [1] : vector<128x8xf32> to vector<128xf32>
    %27 = vector.broadcast %6 : f32 to vector<128xf32>
    %28 = arith.addf %26, %27 : vector<128xf32>
    %29 = vector.shape_cast %28 : vector<128xf32> to vector<1x128xf32>
    %c0_19 = arith.constant 0 : index
    %c0_20 = arith.constant 0 : index
    %30 = vector.load %arg8[%c0_19, %c0_20] : memref<1x128xf32, #tpu.memory_space<vmem>>, vector<1x128xf32>
    tpu.vector_store %arg8[%c0_19, %c0_20], %29 {strides = array<i32>} : memref<1x128xf32, #tpu.memory_space<vmem>>, vector<1x128xf32>,
    return
  }
  func.func @transform_0(%arg0: i32) -> (i32, i32) {
    %c0_i32 = arith.constant 0 : i32
    %c0_i32_0 = arith.constant 0 : i32
    return %arg0, %c0_i32 : i32, i32
  }
  func.func @transform_1(%arg0: i32) -> (i32, i32) {
    %c0_i32 = arith.constant 0 : i32
    %c0_i32_0 = arith.constant 0 : i32
    %c0_i32_1 = arith.constant 0 : i32
    return %c0_i32, %c0_i32_0 : i32, i32
  }
  func.func @transform_2(%arg0: i32) -> (i32, i32) {
    %c0_i32 = arith.constant 0 : i32
    %c0_i32_0 = arith.constant 0 : i32
    %c0_i32_1 = arith.constant 0 : i32
    return %c0_i32, %c0_i32_0 : i32, i32
  }
  func.func @transform_3(%arg0: i32) -> (i32, i32) {
    %c0_i32 = arith.constant 0 : i32
    %c0_i32_0 = arith.constant 0 : i32
    %c0_i32_1 = arith.constant 0 : i32
    return %c0_i32, %c0_i32_0 : i32, i32
  }
  func.func @transform_4(%arg0: i32) -> (i32, i32) {
    %c0_i32 = arith.constant 0 : i32
    %c0_i32_0 = arith.constant 0 : i32
    %c0_i32_1 = arith.constant 0 : i32
    return %c0_i32, %c0_i32_0 : i32, i32
  }
  func.func @transform_5(%arg0: i32) -> (i32, i32) {
    %c0_i32 = arith.constant 0 : i32
    %c0_i32_0 = arith.constant 0 : i32
    %c0_i32_1 = arith.constant 0 : i32
    return %c0_i32, %c0_i32_0 : i32, i32
  }
  func.func @transform_6(%arg0: i32) -> (i32, i32) {
    %c0_i32 = arith.constant 0 : i32
    %c0_i32_0 = arith.constant 0 : i32
    %c0_i32_1 = arith.constant 0 : i32
    return %c0_i32, %c0_i32_0 : i32, i32
  }
  func.func @transform_7(%arg0: i32) -> (i32, i32) {
    %c0_i32 = arith.constant 0 : i32
    %c0_i32_0 = arith.constant 0 : i32
    return %arg0, %c0_i32 : i32, i32
  }
}

</mosaic_0001>

<llo_original>
// kernel: tpu_custom_call.1
$region0: #{tpu_custom_call.1}
  #allocation0 [shape = 'u32[]', space=smem, size = 0x4, offset = 0x4, fixed_abs, tag = 'smem constant byte address 0x4 - core index']
  #allocation1 [shape = 'u32[72,128]{1,0:T(1,128)}', space=vmem, size = 0x9000, scoped, tag = 'internal scratch']
  #allocation2 [shape = 'f32[1,1]{1,0:T(1,128)S(1)}', space=vmem, size = 0x200, scoped, tag = 'scoped memory for tpu_custom_call.1']
  %s0 = inlined_call_operand.vmem [shape: f32[128,32], index: 0, kind: input, shape index: {}]
  %s1 = inlined_call_operand.vmem [shape: f32[32,16], index: 1, kind: input, shape index: {}]
  %s2 = inlined_call_operand.vmem [shape: f32[1,16], index: 2, kind: input, shape index: {}]
  %s3 = inlined_call_operand.vmem [shape: f32[16,8], index: 3, kind: input, shape index: {}]
  %s4 = inlined_call_operand.vmem [shape: f32[1,8], index: 4, kind: input, shape index: {}]
  %s5 = inlined_call_operand.vmem [shape: f32[1,8], index: 5, kind: input, shape index: {}]
  %s6 = inlined_call_operand.<no memory space> [shape: f32[1,1], index: 6, kind: input, shape index: {}]
  %s7 = inlined_call_operand.hbm [shape: f32[1,128], index: 7, kind: output, shape index: {}]
  %s8 = sld [smem:[#allocation0]]
  $region38: #{tpu_custom_call.1} parent=0
    _
  %s10 = ssub.s32 1, %s8
  %s11 = scalar_select 0, %s10, %s8
  %v12 = vstv %s6
  %13 = vst [vmem:[#allocation2] sm:$0x1] %v12
  $region1: #{tpu_custom_call.1} parent=0
    #allocation3 [shape = 'u8[512]{0}', space=vmem, size = 0x400, scoped, tag = 'output window, operand 0, single buffered']
    #allocation4 [shape = 's32[1]{0}', space=sflag, size = 0x4, scoped, tag = 'scoped memory for tpu_custom_call.1']
    %14 = vsyncpa [#allocation4], 0
    // Predicated region
    $region2: #{tpu_custom_call.1} parent=1 // pred_check
      _
    $region3: #{tpu_custom_call.1} parent=1 // pred_check_branch
      %16 = sbr.rel (0) target = $region5
    $region4: #{tpu_custom_call.1} parent=1 // pred_region
      _
    $region5: #{tpu_custom_call.1} parent=1 // pred_fallthru
      _
    // Predicated region
    $region6: #{tpu_custom_call.1} parent=1 // pred_check
      _
    $region7: #{tpu_custom_call.1} parent=1 // pred_check_branch
      %18 = sbr.rel (0) target = $region9
    $region8: #{tpu_custom_call.1} parent=1 // pred_region
      _
    $region9: #{tpu_custom_call.1} parent=1 // pred_fallthru
      _
    // Predicated region
    $region10: #{tpu_custom_call.1} parent=1 // pred_check
      _
    $region11: #{tpu_custom_call.1} parent=1 // pred_check_branch
      %20 = sbr.rel (0) target = $region13
    $region12: #{tpu_custom_call.1} parent=1 // pred_region
      _
    $region13: #{tpu_custom_call.1} parent=1 // pred_fallthru
      _
    // Predicated region
    $region14: #{tpu_custom_call.1} parent=1 // pred_check
      _
    $region15: #{tpu_custom_call.1} parent=1 // pred_check_branch
      %22 = sbr.rel (0) target = $region17
    $region16: #{tpu_custom_call.1} parent=1 // pred_region
      _
    $region17: #{tpu_custom_call.1} parent=1 // pred_fallthru
      _
    // Predicated region
    $region18: #{tpu_custom_call.1} parent=1 // pred_check
      _
    $region19: #{tpu_custom_call.1} parent=1 // pred_check_branch
      %24 = sbr.rel (0) target = $region21
    $region20: #{tpu_custom_call.1} parent=1 // pred_region
      _
    $region21: #{tpu_custom_call.1} parent=1 // pred_fallthru
      _
    // Predicated region
    $region22: #{tpu_custom_call.1} parent=1 // pred_check
      _
    $region23: #{tpu_custom_call.1} parent=1 // pred_check_branch
      %26 = sbr.rel (0) target = $region25
    $region24: #{tpu_custom_call.1} parent=1 // pred_region
      _
    $region25: #{tpu_custom_call.1} parent=1 // pred_fallthru
      _
    // Predicated region
    $region26: #{tpu_custom_call.1} parent=1 // pred_check
      _
    $region27: #{tpu_custom_call.1} parent=1 // pred_check_branch
      %28 = sbr.rel (0) target = $region29
    $region28: #{tpu_custom_call.1} parent=1 // pred_region
      _
    $region29: #{tpu_custom_call.1} parent=1 // pred_fallthru
      _
    %v29 = vld [vmem:[%s1] sm:$0xff]
    %v30 = vld [vmem:[%s1 + $0x8] sm:$0xff]
    %v31 = vld [vmem:[%s1 + $0x10] sm:$0xff]
    %v32 = vld [vmem:[%s1 + $0x18] sm:$0xff]
    %v33 = vld [vmem:[%s2] sm:$0x1]
    %v34 = vld [vmem:[%s3] sm:$0xff]
    %v35 = vld [vmem:[%s3 + $0x8] sm:$0xff]
    %v36 = vld [vmem:[%s4] sm:$0x1]
    %v37 = vld [vmem:[%s5] sm:$0x1]
    %v38 = vld [vmem:[#allocation2] sm:$0x1]
    %s39 = vtos %v38
    %v40 = vld [vmem:[%s0] sm:$0xff]
    %v41 = vld [vmem:[%s0 + $0x8] sm:$0xff]
    %v42 = vld [vmem:[%s0 + $0x10] sm:$0xff]
    %v43 = vld [vmem:[%s0 + $0x18] sm:$0xff]
    %v44 = vld [vmem:[%s0 + $0x20] sm:$0xff]
    %v45 = vld [vmem:[%s0 + $0x28] sm:$0xff]
    %v46 = vld [vmem:[%s0 + $0x30] sm:$0xff]
    %v47 = vld [vmem:[%s0 + $0x38] sm:$0xff]
    %v48 = vld [vmem:[%s0 + $0x40] sm:$0xff]
    %v49 = vld [vmem:[%s0 + $0x48] sm:$0xff]
    %v50 = vld [vmem:[%s0 + $0x50] sm:$0xff]
    %v51 = vld [vmem:[%s0 + $0x58] sm:$0xff]
    %v52 = vld [vmem:[%s0 + $0x60] sm:$0xff]
    %v53 = vld [vmem:[%s0 + $0x68] sm:$0xff]
    %v54 = vld [vmem:[%s0 + $0x70] sm:$0xff]
    %v55 = vld [vmem:[%s0 + $0x78] sm:$0xff]
    %v57 = vperm.slane %v33, 0
    %vm59 = vcmask 261120
    %v61 = vsel %vm59, %v40, 0
    %v64 = vsel %vm59, %v41, 0
    %v67 = vsel %vm59, %v42, 0
    %v70 = vsel %vm59, %v43, 0
    %v73 = vsel %vm59, %v44, 0
    %v76 = vsel %vm59, %v45, 0
    %v79 = vsel %vm59, %v46, 0
    %v82 = vsel %vm59, %v47, 0
    %v85 = vsel %vm59, %v48, 0
    %v88 = vsel %vm59, %v49, 0
    %v91 = vsel %vm59, %v50, 0
    %v94 = vsel %vm59, %v51, 0
    %v97 = vsel %vm59, %v52, 0
    %v100 = vsel %vm59, %v53, 0
    %v103 = vsel %vm59, %v54, 0
    %v106 = vsel %vm59, %v55, 0
    %108 = vmatpush.msra.mxu0 0.0
    %109 = vmatpush.msra.mxu0 0.0
    %110 = vmatpush.msra.mxu0 0.0
    %111 = vmatpush.msra.mxu0 0.0
    %112 = vmatpush.msra.mxu0 0.0
    %113 = vmatpush.msra.mxu0 0.0
    %114 = vmatpush.msra.mxu0 0.0
    %115 = vmatpush.msra.mxu0 0.0
    %116 = vmatpush.msra.mxu0 0.0
    %117 = vmatpush.msra.mxu0 0.0
    %118 = vmatpush.msra.mxu0 0.0
    %119 = vmatpush.msra.mxu0 0.0
    %120 = vmatpush.msra.mxu0 %v32
    %121 = vmatpush.msra.mxu0 %v31
    %122 = vmatpush.msra.mxu0 %v30
    %123 = vmatpush.msra.mxu0 %v29
    %124 = vmatmul.f32.gmra.mxu0 %v61
    %v125 = vpop.f32.mrf.mxu0
    %v126 = vadd.f32 %v57, %v125
    %127 = vmatmul.f32.gmra.mxu0 %v64
    %v128 = vpop.f32.mrf.mxu0
    %v129 = vadd.f32 %v57, %v128
    %130 = vmatmul.f32.gmra.mxu0 %v67
    %v131 = vpop.f32.mrf.mxu0
    %v132 = vadd.f32 %v57, %v131
    %133 = vmatmul.f32.gmra.mxu0 %v70
    %v134 = vpop.f32.mrf.mxu0
    %v135 = vadd.f32 %v57, %v134
    %136 = vmatmul.f32.gmra.mxu0 %v73
    %v137 = vpop.f32.mrf.mxu0
    %v138 = vadd.f32 %v57, %v137
    %139 = vmatmul.f32.gmra.mxu0 %v76
    %v140 = vpop.f32.mrf.mxu0
    %v141 = vadd.f32 %v57, %v140
    %142 = vmatmul.f32.gmra.mxu0 %v79
    %v143 = vpop.f32.mrf.mxu0
    %v144 = vadd.f32 %v57, %v143
    %145 = vmatmul.f32.gmra.mxu0 %v82
    %v146 = vpop.f32.mrf.mxu0
    %v147 = vadd.f32 %v57, %v146
    %148 = vmatmul.f32.gmra.mxu0 %v85
    %v149 = vpop.f32.mrf.mxu0
    %v150 = vadd.f32 %v57, %v149
    %151 = vmatmul.f32.gmra.mxu0 %v88
    %v152 = vpop.f32.mrf.mxu0
    %v153 = vadd.f32 %v57, %v152
    %154 = vmatmul.f32.gmra.mxu0 %v91
    %v155 = vpop.f32.mrf.mxu0
    %v156 = vadd.f32 %v57, %v155
    %157 = vmatmul.f32.gmra.mxu0 %v94
    %v158 = vpop.f32.mrf.mxu0
    %v159 = vadd.f32 %v57, %v158
    %160 = vmatmul.f32.gmra.mxu0 %v97
    %v161 = vpop.f32.mrf.mxu0
    %v162 = vadd.f32 %v57, %v161
    %163 = vmatmul.f32.gmra.mxu0 %v100
    %v164 = vpop.f32.mrf.mxu0
    %v165 = vadd.f32 %v57, %v164
    %166 = vmatmul.f32.gmra.mxu0 %v103
    %v167 = vpop.f32.mrf.mxu0
    %v168 = vadd.f32 %v57, %v167
    %169 = vmatmul.f32.gmra.mxu0 %v106
    %v170 = vpop.f32.mrf.mxu0
    %v171 = vadd.f32 %v57, %v170
    %172 = vdwg.mxu0
    %vm173 = vcmp.ge.f32.partialorder %v126, 0.0
    %vm174 = vcmp.ge.f32.partialorder %v129, 0.0
    %vm175 = vcmp.ge.f32.partialorder %v132, 0.0
    %vm176 = vcmp.ge.f32.partialorder %v135, 0.0
    %vm177 = vcmp.ge.f32.partialorder %v138, 0.0
    %vm178 = vcmp.ge.f32.partialorder %v141, 0.0
    %vm179 = vcmp.ge.f32.partialorder %v144, 0.0
    %vm180 = vcmp.ge.f32.partialorder %v147, 0.0
    %vm181 = vcmp.ge.f32.partialorder %v150, 0.0
    %vm182 = vcmp.ge.f32.partialorder %v153, 0.0
    %vm183 = vcmp.ge.f32.partialorder %v156, 0.0
    %vm184 = vcmp.ge.f32.partialorder %v159, 0.0
    %vm185 = vcmp.ge.f32.partialorder %v162, 0.0
    %vm186 = vcmp.ge.f32.partialorder %v165, 0.0
    %vm187 = vcmp.ge.f32.partialorder %v168, 0.0
    %vm188 = vcmp.ge.f32.partialorder %v171, 0.0
    %v189 = vmul.f32 %v126, 0.2
    %v190 = vmul.f32 %v129, 0.2
    %v191 = vmul.f32 %v132, 0.2
    %v192 = vmul.f32 %v135, 0.2
    %v193 = vmul.f32 %v138, 0.2
    %v194 = vmul.f32 %v141, 0.2
    %v195 = vmul.f32 %v144, 0.2
    %v196 = vmul.f32 %v147, 0.2
    %v197 = vmul.f32 %v150, 0.2
    %v198 = vmul.f32 %v153, 0.2
    %v199 = vmul.f32 %v156, 0.2
    %v200 = vmul.f32 %v159, 0.2
    %v201 = vmul.f32 %v162, 0.2
    %v202 = vmul.f32 %v165, 0.2
    %v203 = vmul.f32 %v168, 0.2
    %v204 = vmul.f32 %v171, 0.2
    %v205 = vsel %vm173, %v126, %v189
    %v206 = vsel %vm174, %v129, %v190
    %v207 = vsel %vm175, %v132, %v191
    %v208 = vsel %vm176, %v135, %v192
    %v209 = vsel %vm177, %v138, %v193
    %v210 = vsel %vm178, %v141, %v194
    %v211 = vsel %vm179, %v144, %v195
    %v212 = vsel %vm180, %v147, %v196
    %v213 = vsel %vm181, %v150, %v197
    %v214 = vsel %vm182, %v153, %v198
    %v215 = vsel %vm183, %v156, %v199
    %v216 = vsel %vm184, %v159, %v200
    %v217 = vsel %vm185, %v162, %v201
    %v218 = vsel %vm186, %v165, %v202
    %v219 = vsel %vm187, %v168, %v203
    %v220 = vsel %vm188, %v171, %v204
    %v222 = vperm.slane %v36, 0
    %vm224 = vcmask 130048
    %v226 = vsel %vm224, %v205, 0
    %v229 = vsel %vm224, %v206, 0
    %v232 = vsel %vm224, %v207, 0
    %v235 = vsel %vm224, %v208, 0
    %v238 = vsel %vm224, %v209, 0
    %v241 = vsel %vm224, %v210, 0
    %v244 = vsel %vm224, %v211, 0
    %v247 = vsel %vm224, %v212, 0
    %v250 = vsel %vm224, %v213, 0
    %v253 = vsel %vm224, %v214, 0
    %v256 = vsel %vm224, %v215, 0
    %v259 = vsel %vm224, %v216, 0
    %v262 = vsel %vm224, %v217, 0
    %v265 = vsel %vm224, %v218, 0
    %v268 = vsel %vm224, %v219, 0
    %v271 = vsel %vm224, %v220, 0
    %273 = vmatpush.msra.mxu0 0.0
    %274 = vmatpush.msra.mxu0 0.0
    %275 = vmatpush.msra.mxu0 0.0
    %276 = vmatpush.msra.mxu0 0.0
    %277 = vmatpush.msra.mxu0 0.0
    %278 = vmatpush.msra.mxu0 0.0
    %279 = vmatpush.msra.mxu0 0.0
    %280 = vmatpush.msra.mxu0 0.0
    %281 = vmatpush.msra.mxu0 0.0
    %282 = vmatpush.msra.mxu0 0.0
    %283 = vmatpush.msra.mxu0 0.0
    %284 = vmatpush.msra.mxu0 0.0
    %285 = vmatpush.msra.mxu0 0.0
    %286 = vmatpush.msra.mxu0 0.0
    %287 = vmatpush.msra.mxu0 %v35
    %288 = vmatpush.msra.mxu0 %v34
    %289 = vmatmul.f32.gmra.mxu0 %v226
    %v290 = vpop.f32.mrf.mxu0
    %v291 = vadd.f32 %v222, %v290
    %292 = vmatmul.f32.gmra.mxu0 %v229
    %v293 = vpop.f32.mrf.mxu0
    %v294 = vadd.f32 %v222, %v293
    %295 = vmatmul.f32.gmra.mxu0 %v232
    %v296 = vpop.f32.mrf.mxu0
    %v297 = vadd.f32 %v222, %v296
    %298 = vmatmul.f32.gmra.mxu0 %v235
    %v299 = vpop.f32.mrf.mxu0
    %v300 = vadd.f32 %v222, %v299
    %301 = vmatmul.f32.gmra.mxu0 %v238
    %v302 = vpop.f32.mrf.mxu0
    %v303 = vadd.f32 %v222, %v302
    %304 = vmatmul.f32.gmra.mxu0 %v241
    %v305 = vpop.f32.mrf.mxu0
    %v306 = vadd.f32 %v222, %v305
    %307 = vmatmul.f32.gmra.mxu0 %v244
    %v308 = vpop.f32.mrf.mxu0
    %v309 = vadd.f32 %v222, %v308
    %310 = vmatmul.f32.gmra.mxu0 %v247
    %v311 = vpop.f32.mrf.mxu0
    %v312 = vadd.f32 %v222, %v311
    %313 = vmatmul.f32.gmra.mxu0 %v250
    %v314 = vpop.f32.mrf.mxu0
    %v315 = vadd.f32 %v222, %v314
    %316 = vmatmul.f32.gmra.mxu0 %v253
    %v317 = vpop.f32.mrf.mxu0
    %v318 = vadd.f32 %v222, %v317
    %319 = vmatmul.f32.gmra.mxu0 %v256
    %v320 = vpop.f32.mrf.mxu0
    %v321 = vadd.f32 %v222, %v320
    %322 = vmatmul.f32.gmra.mxu0 %v259
    %v323 = vpop.f32.mrf.mxu0
    %v324 = vadd.f32 %v222, %v323
    %325 = vmatmul.f32.gmra.mxu0 %v262
    %v326 = vpop.f32.mrf.mxu0
    %v327 = vadd.f32 %v222, %v326
    %328 = vmatmul.f32.gmra.mxu0 %v265
    %v329 = vpop.f32.mrf.mxu0
    %v330 = vadd.f32 %v222, %v329
    %331 = vmatmul.f32.gmra.mxu0 %v268
    %v332 = vpop.f32.mrf.mxu0
    %v333 = vadd.f32 %v222, %v332
    %334 = vmatmul.f32.gmra.mxu0 %v271
    %v335 = vpop.f32.mrf.mxu0
    %v336 = vadd.f32 %v222, %v335
    %337 = vdwg.mxu0
    %vm338 = vcmp.ge.f32.partialorder %v291, 0.0
    %vm339 = vcmp.ge.f32.partialorder %v294, 0.0
    %vm340 = vcmp.ge.f32.partialorder %v297, 0.0
    %vm341 = vcmp.ge.f32.partialorder %v300, 0.0
    %vm342 = vcmp.ge.f32.partialorder %v303, 0.0
    %vm343 = vcmp.ge.f32.partialorder %v306, 0.0
    %vm344 = vcmp.ge.f32.partialorder %v309, 0.0
    %vm345 = vcmp.ge.f32.partialorder %v312, 0.0
    %vm346 = vcmp.ge.f32.partialorder %v315, 0.0
    %vm347 = vcmp.ge.f32.partialorder %v318, 0.0
    %vm348 = vcmp.ge.f32.partialorder %v321, 0.0
    %vm349 = vcmp.ge.f32.partialorder %v324, 0.0
    %vm350 = vcmp.ge.f32.partialorder %v327, 0.0
    %vm351 = vcmp.ge.f32.partialorder %v330, 0.0
    %vm352 = vcmp.ge.f32.partialorder %v333, 0.0
    %vm353 = vcmp.ge.f32.partialorder %v336, 0.0
    %v354 = vmul.f32 %v291, 0.2
    %v355 = vmul.f32 %v294, 0.2
    %v356 = vmul.f32 %v297, 0.2
    %v357 = vmul.f32 %v300, 0.2
    %v358 = vmul.f32 %v303, 0.2
    %v359 = vmul.f32 %v306, 0.2
    %v360 = vmul.f32 %v309, 0.2
    %v361 = vmul.f32 %v312, 0.2
    %v362 = vmul.f32 %v315, 0.2
    %v363 = vmul.f32 %v318, 0.2
    %v364 = vmul.f32 %v321, 0.2
    %v365 = vmul.f32 %v324, 0.2
    %v366 = vmul.f32 %v327, 0.2
    %v367 = vmul.f32 %v330, 0.2
    %v368 = vmul.f32 %v333, 0.2
    %v369 = vmul.f32 %v336, 0.2
    %v370 = vsel %vm338, %v291, %v354
    %v371 = vsel %vm339, %v294, %v355
    %v372 = vsel %vm340, %v297, %v356
    %v373 = vsel %vm341, %v300, %v357
    %v374 = vsel %vm342, %v303, %v358
    %v375 = vsel %vm343, %v306, %v359
    %v376 = vsel %vm344, %v309, %v360
    %v377 = vsel %vm345, %v312, %v361
    %v378 = vsel %vm346, %v315, %v362
    %v379 = vsel %vm347, %v318, %v363
    %v380 = vsel %vm348, %v321, %v364
    %v381 = vsel %vm349, %v324, %v365
    %v382 = vsel %vm350, %v327, %v366
    %v383 = vsel %vm351, %v330, %v367
    %v384 = vsel %vm352, %v333, %v368
    %v385 = vsel %vm353, %v336, %v369
    %v387 = vperm.slane %v37, 0
    %v389 = vmul.f32 %v370, %v387
    %v390 = vmul.f32 %v371, %v387
    %v391 = vmul.f32 %v372, %v387
    %v392 = vmul.f32 %v373, %v387
    %v393 = vmul.f32 %v374, %v387
    %v394 = vmul.f32 %v375, %v387
    %v395 = vmul.f32 %v376, %v387
    %v396 = vmul.f32 %v377, %v387
    %v397 = vmul.f32 %v378, %v387
    %v398 = vmul.f32 %v379, %v387
    %v399 = vmul.f32 %v380, %v387
    %v400 = vmul.f32 %v381, %v387
    %v401 = vmul.f32 %v382, %v387
    %v402 = vmul.f32 %v383, %v387
    %v403 = vmul.f32 %v384, %v387
    %v404 = vmul.f32 %v385, %v387
    %vm405 = vcmask 64512
    %v406 = vsel %vm405, %v389, 0.0
    %407 = vadd.xlane.f32.xlu0 %v406
    %v408 = vpop.xlane.xlu0 %407
    %v409 = vsel %vm405, %v390, 0.0
    %410 = vadd.xlane.f32.xlu0 %v409
    %v411 = vpop.xlane.xlu0 %410
    %v412 = vsel %vm405, %v391, 0.0
    %413 = vadd.xlane.f32.xlu0 %v412
    %v414 = vpop.xlane.xlu0 %413
    %v415 = vsel %vm405, %v392, 0.0
    %416 = vadd.xlane.f32.xlu0 %v415
    %v417 = vpop.xlane.xlu0 %416
    %v418 = vsel %vm405, %v393, 0.0
    %419 = vadd.xlane.f32.xlu0 %v418
    %v420 = vpop.xlane.xlu0 %419
    %v421 = vsel %vm405, %v394, 0.0
    %422 = vadd.xlane.f32.xlu0 %v421
    %v423 = vpop.xlane.xlu0 %422
    %v424 = vsel %vm405, %v395, 0.0
    %425 = vadd.xlane.f32.xlu0 %v424
    %v426 = vpop.xlane.xlu0 %425
    %v427 = vsel %vm405, %v396, 0.0
    %428 = vadd.xlane.f32.xlu0 %v427
    %v429 = vpop.xlane.xlu0 %428
    %v430 = vsel %vm405, %v397, 0.0
    %431 = vadd.xlane.f32.xlu0 %v430
    %v432 = vpop.xlane.xlu0 %431
    %v433 = vsel %vm405, %v398, 0.0
    %434 = vadd.xlane.f32.xlu0 %v433
    %v435 = vpop.xlane.xlu0 %434
    %v436 = vsel %vm405, %v399, 0.0
    %437 = vadd.xlane.f32.xlu0 %v436
    %v438 = vpop.xlane.xlu0 %437
    %v439 = vsel %vm405, %v400, 0.0
    %440 = vadd.xlane.f32.xlu0 %v439
    %v441 = vpop.xlane.xlu0 %440
    %v442 = vsel %vm405, %v401, 0.0
    %443 = vadd.xlane.f32.xlu0 %v442
    %v444 = vpop.xlane.xlu0 %443
    %v445 = vsel %vm405, %v402, 0.0
    %446 = vadd.xlane.f32.xlu0 %v445
    %v447 = vpop.xlane.xlu0 %446
    %v448 = vsel %vm405, %v403, 0.0
    %449 = vadd.xlane.f32.xlu0 %v448
    %v450 = vpop.xlane.xlu0 %449
    %v451 = vsel %vm405, %v404, 0.0
    %452 = vadd.xlane.f32.xlu0 %v451
    %v453 = vpop.xlane.xlu0 %452
    %v454 = vstv %s39
    %v455 = vadd.f32 %v408, %v454
    %v456 = vadd.f32 %v411, %v454
    %v457 = vadd.f32 %v414, %v454
    %v458 = vadd.f32 %v417, %v454
    %v459 = vadd.f32 %v420, %v454
    %v460 = vadd.f32 %v423, %v454
    %v461 = vadd.f32 %v426, %v454
    %v462 = vadd.f32 %v429, %v454
    %v463 = vadd.f32 %v432, %v454
    %v464 = vadd.f32 %v435, %v454
    %v465 = vadd.f32 %v438, %v454
    %v466 = vadd.f32 %v441, %v454
    %v467 = vadd.f32 %v444, %v454
    %v468 = vadd.f32 %v447, %v454
    %v469 = vadd.f32 %v450, %v454
    %v470 = vadd.f32 %v453, %v454
    %v487 = vlaneseq
    %v488 = vand.u32 %v487, 127
    %v489 = vperm.slane %v455, %v488
    %v490 = vadd.s32 %v488, 4294967288
    %v491 = vperm.slane %v456, %v490
    %vm492 = vcmask 130112
    %v493 = vsel %vm492, %v491, %v489
    %v494 = vadd.s32 %v488, 4294967280
    %v495 = vperm.slane %v457, %v494
    %vm496 = vcmask 195712
    %v497 = vsel %vm496, %v495, %v493
    %v498 = vadd.s32 %v488, 4294967272
    %v499 = vperm.slane %v458, %v498
    %vm500 = vcmask 261312
    %v501 = vsel %vm500, %v499, %v497
    %v502 = vadd.s32 %v488, 4294967264
    %v503 = vperm.slane %v459, %v502
    %vm504 = vcmask 326912
    %v505 = vsel %vm504, %v503, %v501
    %v506 = vadd.s32 %v488, 4294967256
    %v507 = vperm.slane %v460, %v506
    %vm508 = vcmask 392512
    %v509 = vsel %vm508, %v507, %v505
    %v510 = vadd.s32 %v488, 4294967248
    %v511 = vperm.slane %v461, %v510
    %vm512 = vcmask 458112
    %v513 = vsel %vm512, %v511, %v509
    %v514 = vadd.s32 %v488, 4294967240
    %v515 = vperm.slane %v462, %v514
    %vm516 = vcmask 523712
    %v517 = vsel %vm516, %v515, %v513
    %v518 = vadd.s32 %v488, 4294967232
    %v519 = vperm.slane %v463, %v518
    %vm520 = vcmask 589312
    %v521 = vsel %vm520, %v519, %v517
    %v522 = vadd.s32 %v488, 4294967224
    %v523 = vperm.slane %v464, %v522
    %vm524 = vcmask 654912
    %v525 = vsel %vm524, %v523, %v521
    %v526 = vadd.s32 %v488, 4294967216
    %v527 = vperm.slane %v465, %v526
    %vm528 = vcmask 720512
    %v529 = vsel %vm528, %v527, %v525
    %v530 = vadd.s32 %v488, 4294967208
    %v531 = vperm.slane %v466, %v530
    %vm532 = vcmask 786112
    %v533 = vsel %vm532, %v531, %v529
    %v534 = vadd.s32 %v488, 4294967200
    %v535 = vperm.slane %v467, %v534
    %vm536 = vcmask 851712
    %v537 = vsel %vm536, %v535, %v533
    %v538 = vadd.s32 %v488, 4294967192
    %v539 = vperm.slane %v468, %v538
    %vm540 = vcmask 917312
    %v541 = vsel %vm540, %v539, %v537
    %v542 = vadd.s32 %v488, 4294967184
    %v543 = vperm.slane %v469, %v542
    %vm544 = vcmask 982912
    %v545 = vsel %vm544, %v543, %v541
    %v546 = vadd.s32 %v488, 4294967176
    %v547 = vperm.slane %v470, %v546
    %vm548 = vcmask 1048512
    %v549 = vsel %vm548, %v547, %v545
    %551 = vst [vmem:[#allocation3] sm:$0x1] %v549
    // Predicated region
    $region30: #{tpu_custom_call.1} parent=1 // pred_check
      _
    $region31: #{tpu_custom_call.1} parent=1 // pred_check_branch
      %553 = sbr.rel (0) target = $region33
    $region32: #{tpu_custom_call.1} parent=1 // pred_region
      %555 = vsyncadd [#allocation4], 0
      %s557 = sshll.u32 [#allocation3], 4
      %s558 = int_to_ptr.vmem [resolvable:$true] %s557
      %s559 = sshll.u32 %s7, 4
      %s560 = int_to_ptr.hbm [resolvable:$true] %s559
      %562 = dma.vmem_to_hbm [thread:$0]  %s558, 16, %s560, [#allocation4]
    $region33: #{tpu_custom_call.1} parent=1 // pred_fallthru
      _
    // Predicated region
    $region34: #{tpu_custom_call.1} parent=1 // pred_check
      _
    $region35: #{tpu_custom_call.1} parent=1 // pred_check_branch
      %564 = sbr.rel (0) target = $region37
    $region36: #{tpu_custom_call.1} parent=1 // pred_region
      %566 = dma.done [#allocation4], 16
    $region37: #{tpu_custom_call.1} parent=1 // pred_fallthru
      _
    %567 = vsyncpa [#allocation4], 1

</llo_original>
